<compile_context>
chip_gen: v5e
topology: v5e:2x2
jax: 0.10.0
libtpu: 0.0.40
codegen_flags: <defaults>
</compile_context>

<pallas_src>
import functools

import jax
import jax.numpy as jnp
from jax import lax
from jax.experimental import pallas as pl
from jax.experimental.pallas import tpu as pltpu


def _round_up(v, m):
    return ((v + m - 1) // m) * m


# ----------------------------------------------------------------------------
# Pallas kernel: one batch-slab per grid step, (C, N*S) lane-dense layout,
# biases folded into the MXU via ones rows, bf16 operands / f32 accumulation.
# ----------------------------------------------------------------------------
def _mlf_kernel(x_ref, xe_ref, w_ref, out_ref, *, nb, cin, s1, s2, kpad):
    # Packed constant slab (bf16); all slices are 16-row aligned -> zero-cost views:
    #   [0        : kpad  )  conv1x1 (BN1-folded) + ones-row selector
    #   [kpad     : 3*kpad)  merged g (first kpad rows, incl. its ones row) and phi
    #   [3*kpad   : 4*kpad)  theta
    #   [4*kpad   : 5*kpad)  W conv (BN2-folded, bias in column Cint)
    w = w_ref[...]
    w1 = w[0:kpad]
    wgphi = w[kpad:3 * kpad]
    wth = w[3 * kpad:4 * kpad]
    ww = w[4 * kpad:5 * kpad]

    x = x_ref[...]      # (kpad, nb*S1) bf16; row Ct == 1, padding rows == 0
    xe = xe_ref[...]    # (kpad, nb*S2) bf16; row Cin == 1, padding rows == 0

    # conv1x1 + folded BN1 + ReLU.  Row `cin` of h is a built-in ones row that
    # carries every downstream bias through the MXU (no VPU bias adds).
    h = jnp.maximum(
        jnp.dot(w1, x, preferred_element_type=jnp.float32), 0.0
    ).astype(jnp.bfloat16)                                       # (kpad, nb*S1)

    # Merged g/phi projection: one MXU pass, tile-aligned split.
    gphi = jnp.dot(wgphi, h, preferred_element_type=jnp.float32
                   ).astype(jnp.bfloat16)                        # (2*kpad, nb*S1)
    g_t = gphi[:kpad]          # rows 0:Cint real, row Cint == 1 (ones row)
    phi_t = gphi[kpad:]        # rows 0:Cint real, rest 0

    th_t = jnp.dot(wth, xe, preferred_element_type=jnp.float32
                   ).astype(jnp.bfloat16)                        # (kpad, nb*S2)

    # Per-batch non-local attention (static unrolled loop, nb is small).
    # TODO(synk): flash-tile over S1 with an online softmax at production sizes.
    ys = []
    for b in range(nb):
        th_b = th_t[:, b * s2:(b + 1) * s2]                      # (kpad, S2)
        phi_b = phi_t[:, b * s1:(b + 1) * s1]                    # (kpad, S1)
        g_b = g_t[:, b * s1:(b + 1) * s1]                        # (kpad, S1)

        # f[s2, s1] = sum_c th_b[c, s2] * phi_b[c, s1]  (no transposed VMEM copies)
        f = lax.dot_general(th_b, phi_b, (((0,), (0,)), ((), ())),
                            preferred_element_type=jnp.float32)  # (S2, S1) f32
        f = f - jnp.max(f, axis=-1, keepdims=True)
        p = jnp.exp(f)
        p = p * pl.reciprocal(jnp.sum(p, axis=-1, keepdims=True), approx=False)

        # y[c, s2] = sum_s1 g_b[c, s1] * p[s2, s1]; row Cint of y == sum(p) == 1,
        # which carries the W-conv / BN2 bias through the final matmul.
        y = lax.dot_general(g_b, p.astype(jnp.bfloat16), (((1,), (1,)), ((), ())),
                            preferred_element_type=jnp.float32)  # (kpad, S2)
        ys.append(y.astype(jnp.bfloat16))

    y_all = ys[0] if nb == 1 else jnp.concatenate(ys, axis=-1)   # (kpad, nb*S2)

    # W conv + folded BN2 (bias folded via y's ones row); lane-dense store.
    out = jnp.dot(ww, y_all, preferred_element_type=jnp.float32)  # (kpad, nb*S2)
    out_ref[...] = out[:cin].astype(out_ref.dtype)


# ----------------------------------------------------------------------------
# Wrapper: layout plumbing, BN folding, constant packing, pallas_call.
# ----------------------------------------------------------------------------
def multi_layer_fusion_block(x_nchw, x_end_nchw, params, eps=1e-5, num_slabs=1):
    """Forward pass of MultiLayerFusionBlock (eval-mode BN, sub_sample=False).

    num_slabs: batch slabs == grid steps.  1 (default) collapses the grid entirely
    (best on v5e/v6e).  On v7x use 2 to give each TensorCore a slab -- only valid
    when (N // num_slabs) * S1 and * S2 are multiples of 128 (production shapes).
    """
    N, Ct, H1, W1 = x_nchw.shape
    _, Cin, H2, W2 = x_end_nchw.shape
    S1, S2 = H1 * W1, H2 * W2
    Cint = params["g_w"].shape[0]

    assert N % num_slabs == 0
    NB = N // num_slabs

    # Contraction width of every matmul: channels + 1 ones row, rounded up to the
    # bf16 sublane tile so all weight-slab slices are tile-aligned.
    Kpad = _round_up(max(Ct, Cin, Cint) + 1, 16)

    f32 = jnp.float32

    # Inputs: NCHW -> channel-major with batch folded into the lane axis, plus an
    # appended ones row (bias carrier) and zero padding up to Kpad rows.
    x_cs = x_nchw.astype(f32).reshape(N, Ct, S1).transpose(1, 0, 2).reshape(Ct, N * S1)
    xe_cs = x_end_nchw.astype(f32).reshape(N, Cin, S2).transpose(1, 0, 2).reshape(Cin, N * S2)
    x_aug = jnp.zeros((Kpad, N * S1), f32).at[:Ct].set(x_cs).at[Ct].set(1.0).astype(jnp.bfloat16)
    xe_aug = jnp.zeros((Kpad, N * S2), f32).at[:Cin].set(xe_cs).at[Cin].set(1.0).astype(jnp.bfloat16)

    # Fold BN1 into conv1x1 (bias-free conv): BN(Wx) = (s*W)x + (beta - s*mean).
    sc1 = params["bn1_gamma"] / jnp.sqrt(params["bn1_var"] + eps)
    w1 = params["conv1x1_w"] * sc1[:, None]
    b1 = params["bn1_beta"] - sc1 * params["bn1_mean"]

    # Fold BN2 into the W conv (has a bias).
    sc2 = params["bn2_gamma"] / jnp.sqrt(params["bn2_var"] + eps)
    ww = params["W_w"] * sc2[:, None]
    bw = sc2 * (params["W_b"] - params["bn2_mean"]) + params["bn2_beta"]

    # Pack every weight + bias into one constant slab (single DMA).
    W = jnp.zeros((5 * Kpad, Kpad), f32)
    # block 0: conv1x1+BN1; row Cin picks x's ones row -> h's ones row.
    W = W.at[0:Cin, 0:Ct].set(w1).at[0:Cin, Ct].set(b1).at[Cin, Ct].set(1.0)
    # block 1: g (bias in col Cin); row Cint picks h's ones row -> y's ones row.
    r = Kpad
    W = (W.at[r:r + Cint, 0:Cin].set(params["g_w"])
          .at[r:r + Cint, Cin].set(params["g_b"])
          .at[r + Cint, Cin].set(1.0))
    # block 2: phi
    r = 2 * Kpad
    W = W.at[r:r + Cint, 0:Cin].set(params["phi_w"]).at[r:r + Cint, Cin].set(params["phi_b"])
    # block 3: theta
    r = 3 * Kpad
    W = W.at[r:r + Cint, 0:Cin].set(params["theta_w"]).at[r:r + Cint, Cin].set(params["theta_b"])
    # block 4: W conv + BN2 (bias in col Cint, multiplied by y's ones row).
    r = 4 * Kpad
    W = W.at[r:r + Cin, 0:Cint].set(ww).at[r:r + Cin, Cint].set(bw)
    w_slab = W.astype(jnp.bfloat16)

    out_cs = pl.pallas_call(
        functools.partial(_mlf_kernel, nb=NB, cin=Cin, s1=S1, s2=S2, kpad=Kpad),
        out_shape=jax.ShapeDtypeStruct((Cin, N * S2), f32),
        grid=(num_slabs,),
        in_specs=[
            pl.BlockSpec((Kpad, NB * S1), lambda s: (0, s)),
            pl.BlockSpec((Kpad, NB * S2), lambda s: (0, s)),
            pl.BlockSpec(w_slab.shape, lambda s: (0, 0)),
        ],
        out_specs=pl.BlockSpec((Cin, NB * S2), lambda s: (0, s)),
        compiler_params=pltpu.CompilerParams(dimension_semantics=("parallel",)),
    )(x_aug, xe_aug, w_slab)

    # (Cin, N*S2) lane-dense slab -> NCHW.
    return out_cs.reshape(Cin, N, S2).transpose(1, 0, 2).reshape(N, Cin, H2, W2)


# ----------------------------------------------------------------------------
# Pure-JAX f32 reference mirroring the PyTorch forward (eval-mode BN).
# ----------------------------------------------------------------------------
def _conv1x1_ref(x, w, b=None):
    y = jnp.einsum("nchw,oc->nohw", x, w)
    if b is not None:
        y = y + b[None, :, None, None]
    return y


def _bn_ref(x, gamma, beta, mean, var, eps=1e-5):
    return (x - mean[None, :, None, None]) / jnp.sqrt(var[None, :, None, None] + eps) \
        * gamma[None, :, None, None] + beta[None, :, None, None]


def reference(x, x_end, p, eps=1e-5):
    N, _, H2, W2 = x_end.shape
    Cint = p["g_w"].shape[0]
    h = _conv1x1_ref(x, p["conv1x1_w"])
    h = jnp.maximum(_bn_ref(h, p["bn1_gamma"], p["bn1_beta"], p["bn1_mean"], p["bn1_var"], eps), 0.0)
    g_x = _conv1x1_ref(h, p["g_w"], p["g_b"]).reshape(N, Cint, -1).transpose(0, 2, 1)
    theta_x = _conv1x1_ref(x_end, p["theta_w"], p["theta_b"]).reshape(N, Cint, -1).transpose(0, 2, 1)
    phi_x = _conv1x1_ref(h, p["phi_w"], p["phi_b"]).reshape(N, Cint, -1)
    f = jnp.einsum("nsc,nct->nst", theta_x, phi_x)
    f_div = jax.nn.softmax(f, axis=-1)
    y = jnp.einsum("nst,ntc->nsc", f_div, g_x)
    y = y.transpose(0, 2, 1).reshape(N, Cint, H2, W2)
    wy = _conv1x1_ref(y, p["W_w"], p["W_b"])
    return _bn_ref(wy, p["bn2_gamma"], p["bn2_beta"], p["bn2_mean"], p["bn2_var"], eps)


# ----------------------------------------------------------------------------
if __name__ == "__main__":
    N = 2
    trans_channels = 8
    in_channels = 8
    inter_channels = in_channels // 2          # 4
    H1 = W1 = 16                               # spatial of x      -> S1 = 256
    H2 = W2 = 8                                # spatial of x_end  -> S2 = 64

    key = jax.random.PRNGKey(0)
    ks = jax.random.split(key, 20)

    def rnd(k, shape, scale=0.2):
        return (scale * jax.random.normal(k, shape)).astype(jnp.float32)

    params = {
        "conv1x1_w": rnd(ks[0], (in_channels, trans_channels)),
        "bn1_gamma": 1.0 + rnd(ks[1], (in_channels,), 0.1),
        "bn1_beta": rnd(ks[2], (in_channels,), 0.1),
        "bn1_mean": rnd(ks[3], (in_channels,), 0.1),
        "bn1_var": jnp.abs(rnd(ks[4], (in_channels,), 0.1)) + 1.0,
        "g_w": rnd(ks[5], (inter_channels, in_channels)),
        "g_b": rnd(ks[6], (inter_channels,), 0.1),
        "theta_w": rnd(ks[7], (inter_channels, in_channels)),
        "theta_b": rnd(ks[8], (inter_channels,), 0.1),
        "phi_w": rnd(ks[9], (inter_channels, in_channels)),
        "phi_b": rnd(ks[10], (inter_channels,), 0.1),
        "W_w": rnd(ks[11], (in_channels, inter_channels)),
        "W_b": rnd(ks[12], (in_channels,), 0.1),
        # torch zero-inits these; we use non-zero synthetic values (see NOTE above)
        "bn2_gamma": 1.0 + rnd(ks[13], (in_channels,), 0.1),
        "bn2_beta": rnd(ks[14], (in_channels,), 0.1),
        "bn2_mean": rnd(ks[15], (in_channels,), 0.1),
        "bn2_var": jnp.abs(rnd(ks[16], (in_channels,), 0.1)) + 1.0,
    }

    x = jax.random.normal(ks[17], (N, trans_channels, H1, W1), dtype=jnp.float32)
    x_end = jax.random.normal(ks[18], (N, in_channels, H2, W2), dtype=jnp.float32)

    out = multi_layer_fusion_block(x, x_end, params)
    out = jax.block_until_ready(out)

    ref = reference(x, x_end, params)
    assert out.shape == (N, in_channels, H2, W2), out.shape
    # Tolerance accounts for bf16 MXU operands (f32 accumulation, f32 softmax math).
    assert jnp.allclose(out, ref, rtol=2e-2, atol=2e-2), float(jnp.max(jnp.abs(out - ref)))

    print("KERNEL_OK")
</pallas_src>

<mosaic_0001>
module attributes {stable_mosaic.version = 11 : i64} {
  func.func @_mlf_kernel(%arg0: i32, %arg1: memref<16x512xbf16, #tpu.memory_space<vmem>>, %arg2: memref<16x128xbf16, #tpu.memory_space<vmem>>, %arg3: memref<80x16xbf16, #tpu.memory_space<vmem>>, %arg4: memref<8x128xf32, #tpu.memory_space<vmem>>) attributes {dimension_semantics = [#tpu.dimension_semantics<parallel>], iteration_bounds = array<i64: 1>, scalar_prefetch = 0 : i64, scratch_operands = 0 : i64, tpu.core_type = #tpu.core_type<tc>, window_params = [{transform_indices = @transform_0, window_bounds = array<i64: 16, 512>}, {transform_indices = @transform_1, window_bounds = array<i64: 16, 128>}, {pipeline_mode = #tpu.pipeline_mode<synchronous>, transform_indices = @transform_2, window_bounds = array<i64: 80, 16>}, {transform_indices = @transform_3, window_bounds = array<i64: 8, 128>}]} {
    %c0 = arith.constant 0 : index
    %c0_0 = arith.constant 0 : index
    %0 = vector.load %arg3[%c0, %c0_0] : memref<80x16xbf16, #tpu.memory_space<vmem>>, vector<80x16xbf16>
    %1 = vector.extract_strided_slice %0 {offsets = [0, 0], sizes = [16, 16], strides = [1, 1]} : vector<80x16xbf16> to vector<16x16xbf16>
    %2 = vector.extract_strided_slice %0 {offsets = [16, 0], sizes = [32, 16], strides = [1, 1]} : vector<80x16xbf16> to vector<32x16xbf16>
    %3 = vector.extract_strided_slice %0 {offsets = [48, 0], sizes = [16, 16], strides = [1, 1]} : vector<80x16xbf16> to vector<16x16xbf16>
    %4 = vector.extract_strided_slice %0 {offsets = [64, 0], sizes = [16, 16], strides = [1, 1]} : vector<80x16xbf16> to vector<16x16xbf16>
    %c0_1 = arith.constant 0 : index
    %c0_2 = arith.constant 0 : index
    %5 = vector.load %arg1[%c0_1, %c0_2] : memref<16x512xbf16, #tpu.memory_space<vmem>>, vector<16x512xbf16>
    %c0_3 = arith.constant 0 : index
    %c0_4 = arith.constant 0 : index
    %6 = vector.load %arg2[%c0_3, %c0_4] : memref<16x128xbf16, #tpu.memory_space<vmem>>, vector<16x128xbf16>
    %cst = arith.constant dense<0.000000e+00> : vector<16x512xf32>
    %7 = tpu.matmul %1, %5, %cst {dimension_numbers = #tpu.dot_dimension_numbers<[1], [0], [0], [1], [0, 0, 1, 1], [], []>} : vector<16x16xbf16>, vector<16x512xbf16>, vector<16x512xf32> -> vector<16x512xf32>
    %cst_5 = arith.constant 0.000000e+00 : f32
    %8 = vector.broadcast %cst_5 : f32 to vector<16x512xf32>
    %9 = arith.maximumf %7, %8 : vector<16x512xf32>
    %10 = arith.truncf %9 : vector<16x512xf32> to vector<16x512xbf16>
    %cst_6 = arith.constant dense<0.000000e+00> : vector<32x512xf32>
    %11 = tpu.matmul %2, %10, %cst_6 {dimension_numbers = #tpu.dot_dimension_numbers<[1], [0], [0], [1], [0, 0, 1, 1], [], []>} : vector<32x16xbf16>, vector<16x512xbf16>, vector<32x512xf32> -> vector<32x512xf32>
    %12 = arith.truncf %11 : vector<32x512xf32> to vector<32x512xbf16>
    %13 = vector.extract_strided_slice %12 {offsets = [0, 0], sizes = [16, 512], strides = [1, 1]} : vector<32x512xbf16> to vector<16x512xbf16>
    %14 = vector.extract_strided_slice %12 {offsets = [16, 0], sizes = [16, 512], strides = [1, 1]} : vector<32x512xbf16> to vector<16x512xbf16>
    %cst_7 = arith.constant dense<0.000000e+00> : vector<16x128xf32>
    %15 = tpu.matmul %3, %6, %cst_7 {dimension_numbers = #tpu.dot_dimension_numbers<[1], [0], [0], [1], [0, 0, 1, 1], [], []>} : vector<16x16xbf16>, vector<16x128xbf16>, vector<16x128xf32> -> vector<16x128xf32>
    %16 = arith.truncf %15 : vector<16x128xf32> to vector<16x128xbf16>
    %17 = vector.extract_strided_slice %16 {offsets = [0, 0], sizes = [16, 64], strides = [1, 1]} : vector<16x128xbf16> to vector<16x64xbf16>
    %18 = vector.extract_strided_slice %14 {offsets = [0, 0], sizes = [16, 256], strides = [1, 1]} : vector<16x512xbf16> to vector<16x256xbf16>
    %19 = vector.extract_strided_slice %13 {offsets = [0, 0], sizes = [16, 256], strides = [1, 1]} : vector<16x512xbf16> to vector<16x256xbf16>
    %cst_8 = arith.constant dense<0.000000e+00> : vector<64x256xf32>
    %20 = tpu.matmul %17, %18, %cst_8 {dimension_numbers = #tpu.dot_dimension_numbers<[0], [0], [1], [1], [0, 1, 1, 1], [], []>} : vector<16x64xbf16>, vector<16x256xbf16>, vector<64x256xf32> -> vector<64x256xf32>
    %cst_9 = arith.constant dense<0xFF800000> : vector<64xf32>
    %21 = vector.multi_reduction <maximumf>, %20, %cst_9 [1] : vector<64x256xf32> to vector<64xf32>
    %22 = vector.shape_cast %21 : vector<64xf32> to vector<64x1xf32>
    %23 = vector.broadcast %22 : vector<64x1xf32> to vector<64x256xf32>
    %24 = arith.subf %20, %23 : vector<64x256xf32>
    %25 = math.exp %24 : vector<64x256xf32>
    %cst_10 = arith.constant dense<0.000000e+00> : vector<64xf32>
    %26 = vector.multi_reduction <add>, %25, %cst_10 [1] : vector<64x256xf32> to vector<64xf32>
    %27 = vector.shape_cast %26 : vector<64xf32> to vector<64x1xf32>
    %28 = tpu.reciprocal %27 : vector<64x1xf32> -> vector<64x1xf32>
    %29 = vector.broadcast %28 : vector<64x1xf32> to vector<64x256xf32>
    %30 = arith.mulf %25, %29 : vector<64x256xf32>
    %31 = arith.truncf %30 : vector<64x256xf32> to vector<64x256xbf16>
    %cst_11 = arith.constant dense<0.000000e+00> : vector<16x64xf32>
    %32 = tpu.matmul %19, %31, %cst_11 {dimension_numbers = #tpu.dot_dimension_numbers<[1], [1], [0], [0], [0, 0, 1, 0], [], []>} : vector<16x256xbf16>, vector<64x256xbf16>, vector<16x64xf32> -> vector<16x64xf32>
    %33 = arith.truncf %32 : vector<16x64xf32> to vector<16x64xbf16>
    %34 = vector.extract_strided_slice %16 {offsets = [0, 64], sizes = [16, 64], strides = [1, 1]} : vector<16x128xbf16> to vector<16x64xbf16>
    %35 = vector.extract_strided_slice %14 {offsets = [0, 256], sizes = [16, 256], strides = [1, 1]} : vector<16x512xbf16> to vector<16x256xbf16>
    %36 = vector.extract_strided_slice %13 {offsets = [0, 256], sizes = [16, 256], strides = [1, 1]} : vector<16x512xbf16> to vector<16x256xbf16>
    %cst_12 = arith.constant dense<0.000000e+00> : vector<64x256xf32>
    %37 = tpu.matmul %34, %35, %cst_12 {dimension_numbers = #tpu.dot_dimension_numbers<[0], [0], [1], [1], [0, 1, 1, 1], [], []>} : vector<16x64xbf16>, vector<16x256xbf16>, vector<64x256xf32> -> vector<64x256xf32>
    %cst_13 = arith.constant dense<0xFF800000> : vector<64xf32>
    %38 = vector.multi_reduction <maximumf>, %37, %cst_13 [1] : vector<64x256xf32> to vector<64xf32>
    %39 = vector.shape_cast %38 : vector<64xf32> to vector<64x1xf32>
    %40 = vector.broadcast %39 : vector<64x1xf32> to vector<64x256xf32>
    %41 = arith.subf %37, %40 : vector<64x256xf32>
    %42 = math.exp %41 : vector<64x256xf32>
    %cst_14 = arith.constant dense<0.000000e+00> : vector<64xf32>
    %43 = vector.multi_reduction <add>, %42, %cst_14 [1] : vector<64x256xf32> to vector<64xf32>
    %44 = vector.shape_cast %43 : vector<64xf32> to vector<64x1xf32>
    %45 = tpu.reciprocal %44 : vector<64x1xf32> -> vector<64x1xf32>
    %46 = vector.broadcast %45 : vector<64x1xf32> to vector<64x256xf32>
    %47 = arith.mulf %42, %46 : vector<64x256xf32>
    %48 = arith.truncf %47 : vector<64x256xf32> to vector<64x256xbf16>
    %cst_15 = arith.constant dense<0.000000e+00> : vector<16x64xf32>
    %49 = tpu.matmul %36, %48, %cst_15 {dimension_numbers = #tpu.dot_dimension_numbers<[1], [1], [0], [0], [0, 0, 1, 0], [], []>} : vector<16x256xbf16>, vector<64x256xbf16>, vector<16x64xf32> -> vector<16x64xf32>
    %50 = arith.truncf %49 : vector<16x64xf32> to vector<16x64xbf16>
    %51 = tpu.concatenate %33, %50 in 1 : vector<16x64xbf16>, vector<16x64xbf16> -> vector<16x128xbf16>
    %cst_16 = arith.constant dense<0.000000e+00> : vector<16x128xf32>
    %52 = tpu.matmul %4, %51, %cst_16 {dimension_numbers = #tpu.dot_dimension_numbers<[1], [0], [0], [1], [0, 0, 1, 1], [], []>} : vector<16x16xbf16>, vector<16x128xbf16>, vector<16x128xf32> -> vector<16x128xf32>
    %53 = vector.extract_strided_slice %52 {offsets = [0, 0], sizes = [8, 128], strides = [1, 1]} : vector<16x128xf32> to vector<8x128xf32>
    %c0_17 = arith.constant 0 : index
    %c0_18 = arith.constant 0 : index
    %54 = vector.load %arg4[%c0_17, %c0_18] : memref<8x128xf32, #tpu.memory_space<vmem>>, vector<8x128xf32>
    tpu.vector_store %arg4[%c0_17, %c0_18], %53 {strides = array<i32>} : memref<8x128xf32, #tpu.memory_space<vmem>>, vector<8x128xf32>,
    return
  }
  func.func @transform_0(%arg0: i32) -> (i32, i32) {
    %c0_i32 = arith.constant 0 : i32
    %c0_i32_0 = arith.constant 0 : i32
    return %c0_i32, %arg0 : i32, i32
  }
  func.func @transform_1(%arg0: i32) -> (i32, i32) {
    %c0_i32 = arith.constant 0 : i32
    %c0_i32_0 = arith.constant 0 : i32
    return %c0_i32, %arg0 : i32, i32
  }
  func.func @transform_2(%arg0: i32) -> (i32, i32) {
    %c0_i32 = arith.constant 0 : i32
    %c0_i32_0 = arith.constant 0 : i32
    %c0_i32_1 = arith.constant 0 : i32
    return %c0_i32, %c0_i32_0 : i32, i32
  }
  func.func @transform_3(%arg0: i32) -> (i32, i32) {
    %c0_i32 = arith.constant 0 : i32
    %c0_i32_0 = arith.constant 0 : i32
    return %c0_i32, %arg0 : i32, i32
  }
}

</mosaic_0001>

<llo_original>
// kernel: tpu_custom_call.1
$region0: #{tpu_custom_call.1}
  #allocation0 [shape = 'u32[]', space=smem, size = 0x4, offset = 0x4, fixed_abs, tag = 'smem constant byte address 0x4 - core index']
  #allocation1 [shape = 'u32[72,128]{1,0:T(1,128)}', space=vmem, size = 0x9000, scoped, tag = 'internal scratch']
  %s0 = inlined_call_operand.vmem [shape: bf16[16,512], index: 0, kind: input, shape index: {}]
  %s1 = inlined_call_operand.vmem [shape: bf16[16,128], index: 1, kind: input, shape index: {}]
  %s2 = inlined_call_operand.vmem [shape: bf16[80,16], index: 2, kind: input, shape index: {}]
  %s3 = inlined_call_operand.hbm [shape: f32[8,128], index: 3, kind: output, shape index: {}]
  %s4 = sld [smem:[#allocation0]]
  $region22: #{tpu_custom_call.1} parent=0
    _
  %s6 = ssub.s32 1, %s4
  %s7 = scalar_select 0, %s6, %s4
  $region1: #{tpu_custom_call.1} parent=0
    #allocation2 [shape = 'u8[4096]{0}', space=vmem, size = 0x1000, scoped, tag = 'output window, operand 0, single buffered']
    #allocation3 [shape = 's32[1]{0}', space=sflag, size = 0x4, scoped, tag = 'scoped memory for tpu_custom_call.1']
    %8 = vsyncpa [#allocation3], 0
    // Predicated region
    $region2: #{tpu_custom_call.1} parent=1 // pred_check
      _
    $region3: #{tpu_custom_call.1} parent=1 // pred_check_branch
      %10 = sbr.rel (0) target = $region5
    $region4: #{tpu_custom_call.1} parent=1 // pred_region
      _
    $region5: #{tpu_custom_call.1} parent=1 // pred_fallthru
      _
    // Predicated region
    $region6: #{tpu_custom_call.1} parent=1 // pred_check
      _
    $region7: #{tpu_custom_call.1} parent=1 // pred_check_branch
      %12 = sbr.rel (0) target = $region9
    $region8: #{tpu_custom_call.1} parent=1 // pred_region
      _
    $region9: #{tpu_custom_call.1} parent=1 // pred_fallthru
      _
    // Predicated region
    $region10: #{tpu_custom_call.1} parent=1 // pred_check
      _
    $region11: #{tpu_custom_call.1} parent=1 // pred_check_branch
      %14 = sbr.rel (0) target = $region13
    $region12: #{tpu_custom_call.1} parent=1 // pred_region
      _
    $region13: #{tpu_custom_call.1} parent=1 // pred_fallthru
      _
    %v16 = vld [vmem:[%s2] sm:$0xf]
    %v17 = vld [vmem:[%s2 + $0x4] sm:$0xf]
    %v18 = vld [vmem:[%s2 + $0x8] sm:$0xf]
    %v19 = vld [vmem:[%s2 + $0xc] sm:$0xf]
    %v20 = vld [vmem:[%s2 + $0x10] sm:$0xf]
    %v21 = vld [vmem:[%s2 + $0x14] sm:$0xf]
    %v22 = vld [vmem:[%s2 + $0x18] sm:$0xf]
    %v23 = vld [vmem:[%s2 + $0x1c] sm:$0xf]
    %v24 = vld [vmem:[%s2 + $0x20] sm:$0xf]
    %v25 = vld [vmem:[%s2 + $0x24] sm:$0xf]
    %v26 = vld [vmem:[%s0] sm:$0xff]
    %v27 = vld [vmem:[%s0 + $0x8] sm:$0xff]
    %v28 = vld [vmem:[%s0 + $0x10] sm:$0xff]
    %v29 = vld [vmem:[%s0 + $0x18] sm:$0xff]
    %v30 = vld [vmem:[%s1] sm:$0xf]
    %v31 = vld [vmem:[%s1 + $0x4] sm:$0xf]
    %v34 = vunpack.c.l.b16 %v16
    %v35 = vunpack.c.l.b16 %v17
    %v36 = vpack.c.b16 %v35, %v34
    %v41 = vunpack.c.l.b16 %v26
    %v42 = vunpack.c.h.b16 %v26
    %v43 = vunpack.c.l.b16 %v27
    %v44 = vunpack.c.h.b16 %v27
    %v45 = vunpack.c.l.b16 %v28
    %v46 = vunpack.c.h.b16 %v28
    %v47 = vunpack.c.l.b16 %v29
    %v48 = vunpack.c.h.b16 %v29
    %v49 = vpack.c.b16 %v45, %v41
    %v50 = vpack.c.b16 %v46, %v42
    %v51 = vpack.c.b16 %v47, %v43
    %v52 = vpack.c.b16 %v48, %v44
    %vm57 = vcmask 130048
    %v59 = vsel %vm57, %v36, 0
    %61 = vmatpush.bf16.msra.mxu0 0
    %62 = vmatpush.bf16.msra.mxu0 0
    %63 = vmatpush.bf16.msra.mxu0 0
    %64 = vmatpush.bf16.msra.mxu0 0
    %65 = vmatpush.bf16.msra.mxu0 0
    %66 = vmatpush.bf16.msra.mxu0 0
    %67 = vmatpush.bf16.msra.mxu0 0
    %68 = vmatpush.bf16.msra.mxu0 %v49
    %69 = vmatmul.bf16.gmra.mxu0 %v59
    %v70 = vpop.f32.mrf.mxu0
    %v71 = vadd.f32 0.0, %v70
    %v72 = vpop.f32.mrf.mxu0
    %v73 = vadd.f32 0.0, %v72
    %74 = vdwg.mxu0
    %75 = vmatpush.bf16.msra.mxu0 0
    %76 = vmatpush.bf16.msra.mxu0 0
    %77 = vmatpush.bf16.msra.mxu0 0
    %78 = vmatpush.bf16.msra.mxu0 0
    %79 = vmatpush.bf16.msra.mxu0 0
    %80 = vmatpush.bf16.msra.mxu0 0
    %81 = vmatpush.bf16.msra.mxu0 0
    %82 = vmatpush.bf16.msra.mxu0 %v50
    %83 = vmatmul.bf16.gmra.mxu0 %v59
    %v84 = vpop.f32.mrf.mxu0
    %v85 = vadd.f32 0.0, %v84
    %v86 = vpop.f32.mrf.mxu0
    %v87 = vadd.f32 0.0, %v86
    %88 = vdwg.mxu0
    %89 = vmatpush.bf16.msra.mxu0 0
    %90 = vmatpush.bf16.msra.mxu0 0
    %91 = vmatpush.bf16.msra.mxu0 0
    %92 = vmatpush.bf16.msra.mxu0 0
    %93 = vmatpush.bf16.msra.mxu0 0
    %94 = vmatpush.bf16.msra.mxu0 0
    %95 = vmatpush.bf16.msra.mxu0 0
    %96 = vmatpush.bf16.msra.mxu0 %v51
    %97 = vmatmul.bf16.gmra.mxu0 %v59
    %v98 = vpop.f32.mrf.mxu0
    %v99 = vadd.f32 0.0, %v98
    %v100 = vpop.f32.mrf.mxu0
    %v101 = vadd.f32 0.0, %v100
    %102 = vdwg.mxu0
    %103 = vmatpush.bf16.msra.mxu0 0
    %104 = vmatpush.bf16.msra.mxu0 0
    %105 = vmatpush.bf16.msra.mxu0 0
    %106 = vmatpush.bf16.msra.mxu0 0
    %107 = vmatpush.bf16.msra.mxu0 0
    %108 = vmatpush.bf16.msra.mxu0 0
    %109 = vmatpush.bf16.msra.mxu0 0
    %110 = vmatpush.bf16.msra.mxu0 %v52
    %111 = vmatmul.bf16.gmra.mxu0 %v59
    %v112 = vpop.f32.mrf.mxu0
    %v113 = vadd.f32 0.0, %v112
    %v114 = vpop.f32.mrf.mxu0
    %v115 = vadd.f32 0.0, %v114
    %116 = vdwg.mxu0
    %v117 = vmax.f32 %v71, 0.0
    %v118 = vmax.f32 %v85, 0.0
    %v119 = vmax.f32 %v99, 0.0
    %v120 = vmax.f32 %v113, 0.0
    %v121 = vmax.f32 %v73, 0.0
    %v122 = vmax.f32 %v87, 0.0
    %v123 = vmax.f32 %v101, 0.0
    %v124 = vmax.f32 %v115, 0.0
    %v125 = vpack.c.bf16 %v121, %v117
    %v126 = vpack.c.bf16 %v122, %v118
    %v127 = vpack.c.bf16 %v123, %v119
    %v128 = vpack.c.bf16 %v124, %v120
    %v133 = vunpack.c.l.b16 %v18
    %v134 = vunpack.c.l.b16 %v19
    %v135 = vunpack.c.l.b16 %v20
    %v136 = vunpack.c.l.b16 %v21
    %v137 = vpack.c.b16 %v134, %v133
    %v138 = vpack.c.b16 %v136, %v135
    %v140 = vsel %vm57, %v137, 0
    %v143 = vsel %vm57, %v138, 0
    %145 = vmatpush.bf16.msra.mxu0 0
    %146 = vmatpush.bf16.msra.mxu0 0
    %147 = vmatpush.bf16.msra.mxu0 0
    %148 = vmatpush.bf16.msra.mxu0 0
    %149 = vmatpush.bf16.msra.mxu0 0
    %150 = vmatpush.bf16.msra.mxu0 0
    %151 = vmatpush.bf16.msra.mxu0 0
    %152 = vmatpush.bf16.msra.mxu0 %v125
    %153 = vmatmul.bf16.gmra.mxu0 %v140
    %v154 = vpop.f32.mrf.mxu0
    %v155 = vadd.f32 0.0, %v154
    %v156 = vpop.f32.mrf.mxu0
    %v157 = vadd.f32 0.0, %v156
    %158 = vmatmul.bf16.gmra.mxu0 %v143
    %v159 = vpop.f32.mrf.mxu0
    %v160 = vadd.f32 0.0, %v159
    %v161 = vpop.f32.mrf.mxu0
    %v162 = vadd.f32 0.0, %v161
    %163 = vdwg.mxu0
    %164 = vmatpush.bf16.msra.mxu0 0
    %165 = vmatpush.bf16.msra.mxu0 0
    %166 = vmatpush.bf16.msra.mxu0 0
    %167 = vmatpush.bf16.msra.mxu0 0
    %168 = vmatpush.bf16.msra.mxu0 0
    %169 = vmatpush.bf16.msra.mxu0 0
    %170 = vmatpush.bf16.msra.mxu0 0
    %171 = vmatpush.bf16.msra.mxu0 %v126
    %172 = vmatmul.bf16.gmra.mxu0 %v140
    %v173 = vpop.f32.mrf.mxu0
    %v174 = vadd.f32 0.0, %v173
    %v175 = vpop.f32.mrf.mxu0
    %v176 = vadd.f32 0.0, %v175
    %177 = vmatmul.bf16.gmra.mxu0 %v143
    %v178 = vpop.f32.mrf.mxu0
    %v179 = vadd.f32 0.0, %v178
    %v180 = vpop.f32.mrf.mxu0
    %v181 = vadd.f32 0.0, %v180
    %182 = vdwg.mxu0
    %183 = vmatpush.bf16.msra.mxu0 0
    %184 = vmatpush.bf16.msra.mxu0 0
    %185 = vmatpush.bf16.msra.mxu0 0
    %186 = vmatpush.bf16.msra.mxu0 0
    %187 = vmatpush.bf16.msra.mxu0 0
    %188 = vmatpush.bf16.msra.mxu0 0
    %189 = vmatpush.bf16.msra.mxu0 0
    %190 = vmatpush.bf16.msra.mxu0 %v127
    %191 = vmatmul.bf16.gmra.mxu0 %v140
    %v192 = vpop.f32.mrf.mxu0
    %v193 = vadd.f32 0.0, %v192
    %v194 = vpop.f32.mrf.mxu0
    %v195 = vadd.f32 0.0, %v194
    %196 = vmatmul.bf16.gmra.mxu0 %v143
    %v197 = vpop.f32.mrf.mxu0
    %v198 = vadd.f32 0.0, %v197
    %v199 = vpop.f32.mrf.mxu0
    %v200 = vadd.f32 0.0, %v199
    %201 = vdwg.mxu0
    %202 = vmatpush.bf16.msra.mxu0 0
    %203 = vmatpush.bf16.msra.mxu0 0
    %204 = vmatpush.bf16.msra.mxu0 0
    %205 = vmatpush.bf16.msra.mxu0 0
    %206 = vmatpush.bf16.msra.mxu0 0
    %207 = vmatpush.bf16.msra.mxu0 0
    %208 = vmatpush.bf16.msra.mxu0 0
    %209 = vmatpush.bf16.msra.mxu0 %v128
    %210 = vmatmul.bf16.gmra.mxu0 %v140
    %v211 = vpop.f32.mrf.mxu0
    %v212 = vadd.f32 0.0, %v211
    %v213 = vpop.f32.mrf.mxu0
    %v214 = vadd.f32 0.0, %v213
    %215 = vmatmul.bf16.gmra.mxu0 %v143
    %v216 = vpop.f32.mrf.mxu0
    %v217 = vadd.f32 0.0, %v216
    %v218 = vpop.f32.mrf.mxu0
    %v219 = vadd.f32 0.0, %v218
    %220 = vdwg.mxu0
    %v221 = vpack.c.bf16 %v174, %v155
    %v222 = vpack.c.bf16 %v212, %v193
    %v223 = vpack.c.bf16 %v176, %v157
    %v224 = vpack.c.bf16 %v214, %v195
    %v225 = vpack.c.bf16 %v179, %v160
    %v226 = vpack.c.bf16 %v217, %v198
    %v227 = vpack.c.bf16 %v181, %v162
    %v228 = vpack.c.bf16 %v219, %v200
    %v231 = vunpack.c.l.b16 %v22
    %v232 = vunpack.c.l.b16 %v23
    %v233 = vpack.c.b16 %v232, %v231
    %v236 = vunpack.c.l.b16 %v30
    %v237 = vunpack.c.l.b16 %v31
    %v238 = vpack.c.b16 %v237, %v236
    %v241 = vsel %vm57, %v233, 0
    %243 = vmatpush.bf16.msra.mxu0 0
    %244 = vmatpush.bf16.msra.mxu0 0
    %245 = vmatpush.bf16.msra.mxu0 0
    %246 = vmatpush.bf16.msra.mxu0 0
    %247 = vmatpush.bf16.msra.mxu0 0
    %248 = vmatpush.bf16.msra.mxu0 0
    %249 = vmatpush.bf16.msra.mxu0 0
    %250 = vmatpush.bf16.msra.mxu0 %v238
    %251 = vmatmul.bf16.gmra.mxu0 %v241
    %v252 = vpop.f32.mrf.mxu0
    %v253 = vadd.f32 0.0, %v252
    %v254 = vpop.f32.mrf.mxu0
    %v255 = vadd.f32 0.0, %v254
    %256 = vdwg.mxu0
    %v257 = vpack.c.bf16 %v253, %v253
    %v258 = vpack.c.bf16 %v255, %v255
    %v261 = vunpack.c.l.b16 %v257
    %v262 = vunpack.c.l.b16 %v258
    %v263 = vpack.c.b16 %v262, %v261
    %265 = vxpose.xlu0.c.b16.start [1/8] %v263, 128
    %266 = vxpose.xlu0.c.b16.cont [2/8] 0, 128
    %267 = vxpose.xlu0.c.b16.cont [3/8] 0, 128
    %268 = vxpose.xlu0.c.b16.cont [4/8] 0, 128
    %269 = vxpose.xlu0.c.b16.cont [5/8] 0, 128
    %270 = vxpose.xlu0.c.b16.cont [6/8] 0, 128
    %271 = vxpose.xlu0.c.b16.cont [7/8] 0, 128
    %272 = vxpose.xlu0.c.b16.end [8/8] 0, 128
    %v273 = vpop.trf.xlu0
    %v274 = vpop.trf.xlu0
    %v275 = vpop.trf.xlu0
    %v276 = vpop.trf.xlu0
    %v277 = vpop.trf.xlu0
    %v278 = vpop.trf.xlu0
    %v279 = vpop.trf.xlu0
    %v280 = vpop.trf.xlu0
    %v283 = vunpack.c.l.b16 %v225
    %v284 = vunpack.c.h.b16 %v225
    %v285 = vunpack.c.l.b16 %v227
    %v286 = vunpack.c.h.b16 %v227
    %v287 = vpack.c.b16 %v285, %v283
    %v288 = vpack.c.b16 %v286, %v284
    %v292 = vsel %vm57, %v273, 0
    %v295 = vsel %vm57, %v274, 0
    %v298 = vsel %vm57, %v275, 0
    %v301 = vsel %vm57, %v276, 0
    %303 = vmatpush.bf16.msra.mxu0 0
    %304 = vmatpush.bf16.msra.mxu0 0
    %305 = vmatpush.bf16.msra.mxu0 0
    %306 = vmatpush.bf16.msra.mxu0 0
    %307 = vmatpush.bf16.msra.mxu0 0
    %308 = vmatpush.bf16.msra.mxu0 0
    %309 = vmatpush.bf16.msra.mxu0 0
    %310 = vmatpush.bf16.msra.mxu0 %v287
    %311 = vmatmul.bf16.gmra.mxu0 %v292
    %v312 = vpop.f32.mrf.mxu0
    %v313 = vadd.f32 0.0, %v312
    %v314 = vpop.f32.mrf.mxu0
    %v315 = vadd.f32 0.0, %v314
    %316 = vmatmul.bf16.gmra.mxu0 %v295
    %v317 = vpop.f32.mrf.mxu0
    %v318 = vadd.f32 0.0, %v317
    %v319 = vpop.f32.mrf.mxu0
    %v320 = vadd.f32 0.0, %v319
    %321 = vmatmul.bf16.gmra.mxu0 %v298
    %v322 = vpop.f32.mrf.mxu0
    %v323 = vadd.f32 0.0, %v322
    %v324 = vpop.f32.mrf.mxu0
    %v325 = vadd.f32 0.0, %v324
    %326 = vmatmul.bf16.gmra.mxu0 %v301
    %v327 = vpop.f32.mrf.mxu0
    %v328 = vadd.f32 0.0, %v327
    %v329 = vpop.f32.mrf.mxu0
    %v330 = vadd.f32 0.0, %v329
    %331 = vdwg.mxu0
    %332 = vmatpush.bf16.msra.mxu0 0
    %333 = vmatpush.bf16.msra.mxu0 0
    %334 = vmatpush.bf16.msra.mxu0 0
    %335 = vmatpush.bf16.msra.mxu0 0
    %336 = vmatpush.bf16.msra.mxu0 0
    %337 = vmatpush.bf16.msra.mxu0 0
    %338 = vmatpush.bf16.msra.mxu0 0
    %339 = vmatpush.bf16.msra.mxu0 %v288
    %340 = vmatmul.bf16.gmra.mxu0 %v292
    %v341 = vpop.f32.mrf.mxu0
    %v342 = vadd.f32 0.0, %v341
    %v343 = vpop.f32.mrf.mxu0
    %v344 = vadd.f32 0.0, %v343
    %345 = vmatmul.bf16.gmra.mxu0 %v295
    %v346 = vpop.f32.mrf.mxu0
    %v347 = vadd.f32 0.0, %v346
    %v348 = vpop.f32.mrf.mxu0
    %v349 = vadd.f32 0.0, %v348
    %350 = vmatmul.bf16.gmra.mxu0 %v298
    %v351 = vpop.f32.mrf.mxu0
    %v352 = vadd.f32 0.0, %v351
    %v353 = vpop.f32.mrf.mxu0
    %v354 = vadd.f32 0.0, %v353
    %355 = vmatmul.bf16.gmra.mxu0 %v301
    %v356 = vpop.f32.mrf.mxu0
    %v357 = vadd.f32 0.0, %v356
    %v358 = vpop.f32.mrf.mxu0
    %v359 = vadd.f32 0.0, %v358
    %360 = vdwg.mxu0
    %v361 = vmax.f32 %v313, %v342
    %362 = vmax.xlane.f32.xlu0 %v361
    %v363 = vpop.xlane.xlu0 %362
    %v364 = vmax.f32 %v315, %v344
    %365 = vmax.xlane.f32.xlu0 %v364
    %v366 = vpop.xlane.xlu0 %365
    %v367 = vmax.f32 %v318, %v347
    %368 = vmax.xlane.f32.xlu0 %v367
    %v369 = vpop.xlane.xlu0 %368
    %v370 = vmax.f32 %v320, %v349
    %371 = vmax.xlane.f32.xlu0 %v370
    %v372 = vpop.xlane.xlu0 %371
    %v373 = vmax.f32 %v323, %v352
    %374 = vmax.xlane.f32.xlu0 %v373
    %v375 = vpop.xlane.xlu0 %374
    %v376 = vmax.f32 %v325, %v354
    %377 = vmax.xlane.f32.xlu0 %v376
    %v378 = vpop.xlane.xlu0 %377
    %v379 = vmax.f32 %v328, %v357
    %380 = vmax.xlane.f32.xlu0 %v379
    %v381 = vpop.xlane.xlu0 %380
    %v382 = vmax.f32 %v330, %v359
    %383 = vmax.xlane.f32.xlu0 %v382
    %v384 = vpop.xlane.xlu0 %383
    %v385 = vsub.f32 %v313, %v363
    %v386 = vsub.f32 %v342, %v363
    %v387 = vsub.f32 %v315, %v366
    %v388 = vsub.f32 %v344, %v366
    %v389 = vsub.f32 %v318, %v369
    %v390 = vsub.f32 %v347, %v369
    %v391 = vsub.f32 %v320, %v372
    %v392 = vsub.f32 %v349, %v372
    %v393 = vsub.f32 %v323, %v375
    %v394 = vsub.f32 %v352, %v375
    %v395 = vsub.f32 %v325, %v378
    %v396 = vsub.f32 %v354, %v378
    %v397 = vsub.f32 %v328, %v381
    %v398 = vsub.f32 %v357, %v381
    %v399 = vsub.f32 %v330, %v384
    %v400 = vsub.f32 %v359, %v384
    %v401 = vmul.f32 %v385, 1.442695
    %v402 = vpow.pop %v401
    %v403 = vmul.f32 %v386, 1.442695
    %v404 = vpow.pop %v403
    %v405 = vmul.f32 %v387, 1.442695
    %v406 = vpow.pop %v405
    %v407 = vmul.f32 %v388, 1.442695
    %v408 = vpow.pop %v407
    %v409 = vmul.f32 %v389, 1.442695
    %v410 = vpow.pop %v409
    %v411 = vmul.f32 %v390, 1.442695
    %v412 = vpow.pop %v411
    %v413 = vmul.f32 %v391, 1.442695
    %v414 = vpow.pop %v413
    %v415 = vmul.f32 %v392, 1.442695
    %v416 = vpow.pop %v415
    %v417 = vmul.f32 %v393, 1.442695
    %v418 = vpow.pop %v417
    %v419 = vmul.f32 %v394, 1.442695
    %v420 = vpow.pop %v419
    %v421 = vmul.f32 %v395, 1.442695
    %v422 = vpow.pop %v421
    %v423 = vmul.f32 %v396, 1.442695
    %v424 = vpow.pop %v423
    %v425 = vmul.f32 %v397, 1.442695
    %v426 = vpow.pop %v425
    %v427 = vmul.f32 %v398, 1.442695
    %v428 = vpow.pop %v427
    %v429 = vmul.f32 %v399, 1.442695
    %v430 = vpow.pop %v429
    %v431 = vmul.f32 %v400, 1.442695
    %v432 = vpow.pop %v431
    %v433 = vadd.f32 %v402, %v404
    %434 = vadd.xlane.f32.xlu0 %v433
    %v435 = vpop.xlane.xlu0 %434
    %v436 = vadd.f32 %v406, %v408
    %437 = vadd.xlane.f32.xlu0 %v436
    %v438 = vpop.xlane.xlu0 %437
    %v439 = vadd.f32 %v410, %v412
    %440 = vadd.xlane.f32.xlu0 %v439
    %v441 = vpop.xlane.xlu0 %440
    %v442 = vadd.f32 %v414, %v416
    %443 = vadd.xlane.f32.xlu0 %v442
    %v444 = vpop.xlane.xlu0 %443
    %v445 = vadd.f32 %v418, %v420
    %446 = vadd.xlane.f32.xlu0 %v445
    %v447 = vpop.xlane.xlu0 %446
    %v448 = vadd.f32 %v422, %v424
    %449 = vadd.xlane.f32.xlu0 %v448
    %v450 = vpop.xlane.xlu0 %449
    %v451 = vadd.f32 %v426, %v428
    %452 = vadd.xlane.f32.xlu0 %v451
    %v453 = vpop.xlane.xlu0 %452
    %v454 = vadd.f32 %v430, %v432
    %455 = vadd.xlane.f32.xlu0 %v454
    %v456 = vpop.xlane.xlu0 %455
    %v457 = vrcp.pop %v435
    %v458 = vmul.f32 %v435, %v457
    %v459 = vsub.f32 1.0, %v458
    %v460 = vmul.f32 %v457, %v459
    %v461 = vadd.f32 %v457, %v460
    %vm462 = vweird.f32 %v435
    %vm463 = vweird.f32 %v457
    %vm464 = vmor %vm462, %vm463
    %v465 = vsel %vm464, %v457, %v461
    %v466 = vand.u32 2147483647, %v435
    %vm467 = vcmp.eq.f32.partialorder %v466, 8.507059e+37
    %v468 = vand.u32 %v435, 2147483648
    %v469 = vor.u32 1.1754944e-38, %v468
    %v470 = vsel %vm467, %v469, %v465
    %v471 = vrcp.pop %v438
    %v472 = vmul.f32 %v438, %v471
    %v473 = vsub.f32 1.0, %v472
    %v474 = vmul.f32 %v471, %v473
    %v475 = vadd.f32 %v471, %v474
    %vm476 = vweird.f32 %v438
    %vm477 = vweird.f32 %v471
    %vm478 = vmor %vm476, %vm477
    %v479 = vsel %vm478, %v471, %v475
    %v480 = vand.u32 2147483647, %v438
    %vm481 = vcmp.eq.f32.partialorder %v480, 8.507059e+37
    %v482 = vand.u32 %v438, 2147483648
    %v483 = vor.u32 1.1754944e-38, %v482
    %v484 = vsel %vm481, %v483, %v479
    %v485 = vrcp.pop %v441
    %v486 = vmul.f32 %v441, %v485
    %v487 = vsub.f32 1.0, %v486
    %v488 = vmul.f32 %v485, %v487
    %v489 = vadd.f32 %v485, %v488
    %vm490 = vweird.f32 %v441
    %vm491 = vweird.f32 %v485
    %vm492 = vmor %vm490, %vm491
    %v493 = vsel %vm492, %v485, %v489
    %v494 = vand.u32 2147483647, %v441
    %vm495 = vcmp.eq.f32.partialorder %v494, 8.507059e+37
    %v496 = vand.u32 %v441, 2147483648
    %v497 = vor.u32 1.1754944e-38, %v496
    %v498 = vsel %vm495, %v497, %v493
    %v499 = vrcp.pop %v444
    %v500 = vmul.f32 %v444, %v499
    %v501 = vsub.f32 1.0, %v500
    %v502 = vmul.f32 %v499, %v501
    %v503 = vadd.f32 %v499, %v502
    %vm504 = vweird.f32 %v444
    %vm505 = vweird.f32 %v499
    %vm506 = vmor %vm504, %vm505
    %v507 = vsel %vm506, %v499, %v503
    %v508 = vand.u32 2147483647, %v444
    %vm509 = vcmp.eq.f32.partialorder %v508, 8.507059e+37
    %v510 = vand.u32 %v444, 2147483648
    %v511 = vor.u32 1.1754944e-38, %v510
    %v512 = vsel %vm509, %v511, %v507
    %v513 = vrcp.pop %v447
    %v514 = vmul.f32 %v447, %v513
    %v515 = vsub.f32 1.0, %v514
    %v516 = vmul.f32 %v513, %v515
    %v517 = vadd.f32 %v513, %v516
    %vm518 = vweird.f32 %v447
    %vm519 = vweird.f32 %v513
    %vm520 = vmor %vm518, %vm519
    %v521 = vsel %vm520, %v513, %v517
    %v522 = vand.u32 2147483647, %v447
    %vm523 = vcmp.eq.f32.partialorder %v522, 8.507059e+37
    %v524 = vand.u32 %v447, 2147483648
    %v525 = vor.u32 1.1754944e-38, %v524
    %v526 = vsel %vm523, %v525, %v521
    %v527 = vrcp.pop %v450
    %v528 = vmul.f32 %v450, %v527
    %v529 = vsub.f32 1.0, %v528
    %v530 = vmul.f32 %v527, %v529
    %v531 = vadd.f32 %v527, %v530
    %vm532 = vweird.f32 %v450
    %vm533 = vweird.f32 %v527
    %vm534 = vmor %vm532, %vm533
    %v535 = vsel %vm534, %v527, %v531
    %v536 = vand.u32 2147483647, %v450
    %vm537 = vcmp.eq.f32.partialorder %v536, 8.507059e+37
    %v538 = vand.u32 %v450, 2147483648
    %v539 = vor.u32 1.1754944e-38, %v538
    %v540 = vsel %vm537, %v539, %v535
    %v541 = vrcp.pop %v453
    %v542 = vmul.f32 %v453, %v541
    %v543 = vsub.f32 1.0, %v542
    %v544 = vmul.f32 %v541, %v543
    %v545 = vadd.f32 %v541, %v544
    %vm546 = vweird.f32 %v453
    %vm547 = vweird.f32 %v541
    %vm548 = vmor %vm546, %vm547
    %v549 = vsel %vm548, %v541, %v545
    %v550 = vand.u32 2147483647, %v453
    %vm551 = vcmp.eq.f32.partialorder %v550, 8.507059e+37
    %v552 = vand.u32 %v453, 2147483648
    %v553 = vor.u32 1.1754944e-38, %v552
    %v554 = vsel %vm551, %v553, %v549
    %v555 = vrcp.pop %v456
    %v556 = vmul.f32 %v456, %v555
    %v557 = vsub.f32 1.0, %v556
    %v558 = vmul.f32 %v555, %v557
    %v559 = vadd.f32 %v555, %v558
    %vm560 = vweird.f32 %v456
    %vm561 = vweird.f32 %v555
    %vm562 = vmor %vm560, %vm561
    %v563 = vsel %vm562, %v555, %v559
    %v564 = vand.u32 2147483647, %v456
    %vm565 = vcmp.eq.f32.partialorder %v564, 8.507059e+37
    %v566 = vand.u32 %v456, 2147483648
    %v567 = vor.u32 1.1754944e-38, %v566
    %v568 = vsel %vm565, %v567, %v563
    %v569 = vmul.f32 %v402, %v470
    %v570 = vmul.f32 %v404, %v470
    %v571 = vmul.f32 %v406, %v484
    %v572 = vmul.f32 %v408, %v484
    %v573 = vmul.f32 %v410, %v498
    %v574 = vmul.f32 %v412, %v498
    %v575 = vmul.f32 %v414, %v512
    %v576 = vmul.f32 %v416, %v512
    %v577 = vmul.f32 %v418, %v526
    %v578 = vmul.f32 %v420, %v526
    %v579 = vmul.f32 %v422, %v540
    %v580 = vmul.f32 %v424, %v540
    %v581 = vmul.f32 %v426, %v554
    %v582 = vmul.f32 %v428, %v554
    %v583 = vmul.f32 %v430, %v568
    %v584 = vmul.f32 %v432, %v568
    %v585 = vpack.c.bf16 %v571, %v569
    %v586 = vpack.c.bf16 %v572, %v570
    %v587 = vpack.c.bf16 %v575, %v573
    %v588 = vpack.c.bf16 %v576, %v574
    %v589 = vpack.c.bf16 %v579, %v577
    %v590 = vpack.c.bf16 %v580, %v578
    %v591 = vpack.c.bf16 %v583, %v581
    %v592 = vpack.c.bf16 %v584, %v582
    %v595 = vunpack.c.l.b16 %v221
    %v596 = vunpack.c.h.b16 %v221
    %v597 = vunpack.c.l.b16 %v223
    %v598 = vunpack.c.h.b16 %v223
    %v599 = vpack.c.b16 %v597, %v595
    %v600 = vpack.c.b16 %v598, %v596
    %603 = vmatpush.bf16.xpose.msra.mxu0 0
    %604 = vmatpush.bf16.xpose.msra.mxu0 0
    %605 = vmatpush.bf16.xpose.msra.mxu0 0
    %606 = vmatpush.bf16.xpose.msra.mxu0 0
    %607 = vmatpush.bf16.xpose.msra.mxu0 %v591
    %608 = vmatpush.bf16.xpose.msra.mxu0 %v589
    %609 = vmatpush.bf16.xpose.msra.mxu0 %v587
    %610 = vmatpush.bf16.xpose.msra.mxu0 %v585
    %611 = vmatmul.bf16.gmra.mxu0 %v599
    %v612 = vpop.f32.mrf.mxu0
    %v613 = vadd.f32 0.0, %v612
    %v614 = vpop.f32.mrf.mxu0
    %v615 = vadd.f32 0.0, %v614
    %616 = vdwg.mxu0
    %617 = vmatpush.bf16.xpose.msra.mxu0 0
    %618 = vmatpush.bf16.xpose.msra.mxu0 0
    %619 = vmatpush.bf16.xpose.msra.mxu0 0
    %620 = vmatpush.bf16.xpose.msra.mxu0 0
    %621 = vmatpush.bf16.xpose.msra.mxu0 %v592
    %622 = vmatpush.bf16.xpose.msra.mxu0 %v590
    %623 = vmatpush.bf16.xpose.msra.mxu0 %v588
    %624 = vmatpush.bf16.xpose.msra.mxu0 %v586
    %625 = vmatmul.bf16.gmra.mxu0 %v600
    %v626 = vpop.f32.mrf.mxu0
    %v627 = vadd.f32 %v613, %v626
    %v628 = vpop.f32.mrf.mxu0
    %v629 = vadd.f32 %v615, %v628
    %630 = vdwg.mxu0
    %v631 = vpack.c.bf16 %v627, %v627
    %v632 = vpack.c.bf16 %v629, %v629
    %633 = vrot.lane.b32.xlu0 %v263, 64
    %v634 = vpop.permute.xlu0 %633
    %636 = vxpose.xlu0.c.b16.start [1/8] %v634, 128
    %637 = vxpose.xlu0.c.b16.cont [2/8] 0, 128
    %638 = vxpose.xlu0.c.b16.cont [3/8] 0, 128
    %639 = vxpose.xlu0.c.b16.cont [4/8] 0, 128
    %640 = vxpose.xlu0.c.b16.cont [5/8] 0, 128
    %641 = vxpose.xlu0.c.b16.cont [6/8] 0, 128
    %642 = vxpose.xlu0.c.b16.cont [7/8] 0, 128
    %643 = vxpose.xlu0.c.b16.end [8/8] 0, 128
    %v644 = vpop.trf.xlu0
    %v645 = vpop.trf.xlu0
    %v646 = vpop.trf.xlu0
    %v647 = vpop.trf.xlu0
    %v648 = vpop.trf.xlu0
    %v649 = vpop.trf.xlu0
    %v650 = vpop.trf.xlu0
    %v651 = vpop.trf.xlu0
    %v654 = vunpack.c.l.b16 %v226
    %v655 = vunpack.c.h.b16 %v226
    %v656 = vunpack.c.l.b16 %v228
    %v657 = vunpack.c.h.b16 %v228
    %v658 = vpack.c.b16 %v656, %v654
    %v659 = vpack.c.b16 %v657, %v655
    %v663 = vsel %vm57, %v644, 0
    %v666 = vsel %vm57, %v645, 0
    %v669 = vsel %vm57, %v646, 0
    %v672 = vsel %vm57, %v647, 0
    %674 = vmatpush.bf16.msra.mxu0 0
    %675 = vmatpush.bf16.msra.mxu0 0
    %676 = vmatpush.bf16.msra.mxu0 0
    %677 = vmatpush.bf16.msra.mxu0 0
    %678 = vmatpush.bf16.msra.mxu0 0
    %679 = vmatpush.bf16.msra.mxu0 0
    %680 = vmatpush.bf16.msra.mxu0 0
    %681 = vmatpush.bf16.msra.mxu0 %v658
    %682 = vmatmul.bf16.gmra.mxu0 %v663
    %v683 = vpop.f32.mrf.mxu0
    %v684 = vadd.f32 0.0, %v683
    %v685 = vpop.f32.mrf.mxu0
    %v686 = vadd.f32 0.0, %v685
    %687 = vmatmul.bf16.gmra.mxu0 %v666
    %v688 = vpop.f32.mrf.mxu0
    %v689 = vadd.f32 0.0, %v688
    %v690 = vpop.f32.mrf.mxu0
    %v691 = vadd.f32 0.0, %v690
    %692 = vmatmul.bf16.gmra.mxu0 %v669
    %v693 = vpop.f32.mrf.mxu0
    %v694 = vadd.f32 0.0, %v693
    %v695 = vpop.f32.mrf.mxu0
    %v696 = vadd.f32 0.0, %v695
    %697 = vmatmul.bf16.gmra.mxu0 %v672
    %v698 = vpop.f32.mrf.mxu0
    %v699 = vadd.f32 0.0, %v698
    %v700 = vpop.f32.mrf.mxu0
    %v701 = vadd.f32 0.0, %v700
    %702 = vdwg.mxu0
    %703 = vmatpush.bf16.msra.mxu0 0
    %704 = vmatpush.bf16.msra.mxu0 0
    %705 = vmatpush.bf16.msra.mxu0 0
    %706 = vmatpush.bf16.msra.mxu0 0
    %707 = vmatpush.bf16.msra.mxu0 0
    %708 = vmatpush.bf16.msra.mxu0 0
    %709 = vmatpush.bf16.msra.mxu0 0
    %710 = vmatpush.bf16.msra.mxu0 %v659
    %711 = vmatmul.bf16.gmra.mxu0 %v663
    %v712 = vpop.f32.mrf.mxu0
    %v713 = vadd.f32 0.0, %v712
    %v714 = vpop.f32.mrf.mxu0
    %v715 = vadd.f32 0.0, %v714
    %716 = vmatmul.bf16.gmra.mxu0 %v666
    %v717 = vpop.f32.mrf.mxu0
    %v718 = vadd.f32 0.0, %v717
    %v719 = vpop.f32.mrf.mxu0
    %v720 = vadd.f32 0.0, %v719
    %721 = vmatmul.bf16.gmra.mxu0 %v669
    %v722 = vpop.f32.mrf.mxu0
    %v723 = vadd.f32 0.0, %v722
    %v724 = vpop.f32.mrf.mxu0
    %v725 = vadd.f32 0.0, %v724
    %726 = vmatmul.bf16.gmra.mxu0 %v672
    %v727 = vpop.f32.mrf.mxu0
    %v728 = vadd.f32 0.0, %v727
    %v729 = vpop.f32.mrf.mxu0
    %v730 = vadd.f32 0.0, %v729
    %731 = vdwg.mxu0
    %v732 = vmax.f32 %v684, %v713
    %733 = vmax.xlane.f32.xlu0 %v732
    %v734 = vpop.xlane.xlu0 %733
    %v735 = vmax.f32 %v686, %v715
    %736 = vmax.xlane.f32.xlu0 %v735
    %v737 = vpop.xlane.xlu0 %736
    %v738 = vmax.f32 %v689, %v718
    %739 = vmax.xlane.f32.xlu0 %v738
    %v740 = vpop.xlane.xlu0 %739
    %v741 = vmax.f32 %v691, %v720
    %742 = vmax.xlane.f32.xlu0 %v741
    %v743 = vpop.xlane.xlu0 %742
    %v744 = vmax.f32 %v694, %v723
    %745 = vmax.xlane.f32.xlu0 %v744
    %v746 = vpop.xlane.xlu0 %745
    %v747 = vmax.f32 %v696, %v725
    %748 = vmax.xlane.f32.xlu0 %v747
    %v749 = vpop.xlane.xlu0 %748
    %v750 = vmax.f32 %v699, %v728
    %751 = vmax.xlane.f32.xlu0 %v750
    %v752 = vpop.xlane.xlu0 %751
    %v753 = vmax.f32 %v701, %v730
    %754 = vmax.xlane.f32.xlu0 %v753
    %v755 = vpop.xlane.xlu0 %754
    %v756 = vsub.f32 %v684, %v734
    %v757 = vsub.f32 %v713, %v734
    %v758 = vsub.f32 %v686, %v737
    %v759 = vsub.f32 %v715, %v737
    %v760 = vsub.f32 %v689, %v740
    %v761 = vsub.f32 %v718, %v740
    %v762 = vsub.f32 %v691, %v743
    %v763 = vsub.f32 %v720, %v743
    %v764 = vsub.f32 %v694, %v746
    %v765 = vsub.f32 %v723, %v746
    %v766 = vsub.f32 %v696, %v749
    %v767 = vsub.f32 %v725, %v749
    %v768 = vsub.f32 %v699, %v752
    %v769 = vsub.f32 %v728, %v752
    %v770 = vsub.f32 %v701, %v755
    %v771 = vsub.f32 %v730, %v755
    %v772 = vmul.f32 %v756, 1.442695
    %v773 = vpow.pop %v772
    %v774 = vmul.f32 %v757, 1.442695
    %v775 = vpow.pop %v774
    %v776 = vmul.f32 %v758, 1.442695
    %v777 = vpow.pop %v776
    %v778 = vmul.f32 %v759, 1.442695
    %v779 = vpow.pop %v778
    %v780 = vmul.f32 %v760, 1.442695
    %v781 = vpow.pop %v780
    %v782 = vmul.f32 %v761, 1.442695
    %v783 = vpow.pop %v782
    %v784 = vmul.f32 %v762, 1.442695
    %v785 = vpow.pop %v784
    %v786 = vmul.f32 %v763, 1.442695
    %v787 = vpow.pop %v786
    %v788 = vmul.f32 %v764, 1.442695
    %v789 = vpow.pop %v788
    %v790 = vmul.f32 %v765, 1.442695
    %v791 = vpow.pop %v790
    %v792 = vmul.f32 %v766, 1.442695
    %v793 = vpow.pop %v792
    %v794 = vmul.f32 %v767, 1.442695
    %v795 = vpow.pop %v794
    %v796 = vmul.f32 %v768, 1.442695
    %v797 = vpow.pop %v796
    %v798 = vmul.f32 %v769, 1.442695
    %v799 = vpow.pop %v798
    %v800 = vmul.f32 %v770, 1.442695
    %v801 = vpow.pop %v800
    %v802 = vmul.f32 %v771, 1.442695
    %v803 = vpow.pop %v802
    %v804 = vadd.f32 %v773, %v775
    %805 = vadd.xlane.f32.xlu0 %v804
    %v806 = vpop.xlane.xlu0 %805
    %v807 = vadd.f32 %v777, %v779
    %808 = vadd.xlane.f32.xlu0 %v807
    %v809 = vpop.xlane.xlu0 %808
    %v810 = vadd.f32 %v781, %v783
    %811 = vadd.xlane.f32.xlu0 %v810
    %v812 = vpop.xlane.xlu0 %811
    %v813 = vadd.f32 %v785, %v787
    %814 = vadd.xlane.f32.xlu0 %v813
    %v815 = vpop.xlane.xlu0 %814
    %v816 = vadd.f32 %v789, %v791
    %817 = vadd.xlane.f32.xlu0 %v816
    %v818 = vpop.xlane.xlu0 %817
    %v819 = vadd.f32 %v793, %v795
    %820 = vadd.xlane.f32.xlu0 %v819
    %v821 = vpop.xlane.xlu0 %820
    %v822 = vadd.f32 %v797, %v799
    %823 = vadd.xlane.f32.xlu0 %v822
    %v824 = vpop.xlane.xlu0 %823
    %v825 = vadd.f32 %v801, %v803
    %826 = vadd.xlane.f32.xlu0 %v825
    %v827 = vpop.xlane.xlu0 %826
    %v828 = vrcp.pop %v806
    %v829 = vmul.f32 %v806, %v828
    %v830 = vsub.f32 1.0, %v829
    %v831 = vmul.f32 %v828, %v830
    %v832 = vadd.f32 %v828, %v831
    %vm833 = vweird.f32 %v806
    %vm834 = vweird.f32 %v828
    %vm835 = vmor %vm833, %vm834
    %v836 = vsel %vm835, %v828, %v832
    %v837 = vand.u32 2147483647, %v806
    %vm838 = vcmp.eq.f32.partialorder %v837, 8.507059e+37
    %v839 = vand.u32 %v806, 2147483648
    %v840 = vor.u32 1.1754944e-38, %v839
    %v841 = vsel %vm838, %v840, %v836
    %v842 = vrcp.pop %v809
    %v843 = vmul.f32 %v809, %v842
    %v844 = vsub.f32 1.0, %v843
    %v845 = vmul.f32 %v842, %v844
    %v846 = vadd.f32 %v842, %v845
    %vm847 = vweird.f32 %v809
    %vm848 = vweird.f32 %v842
    %vm849 = vmor %vm847, %vm848
    %v850 = vsel %vm849, %v842, %v846
    %v851 = vand.u32 2147483647, %v809
    %vm852 = vcmp.eq.f32.partialorder %v851, 8.507059e+37
    %v853 = vand.u32 %v809, 2147483648
    %v854 = vor.u32 1.1754944e-38, %v853
    %v855 = vsel %vm852, %v854, %v850
    %v856 = vrcp.pop %v812
    %v857 = vmul.f32 %v812, %v856
    %v858 = vsub.f32 1.0, %v857
    %v859 = vmul.f32 %v856, %v858
    %v860 = vadd.f32 %v856, %v859
    %vm861 = vweird.f32 %v812
    %vm862 = vweird.f32 %v856
    %vm863 = vmor %vm861, %vm862
    %v864 = vsel %vm863, %v856, %v860
    %v865 = vand.u32 2147483647, %v812
    %vm866 = vcmp.eq.f32.partialorder %v865, 8.507059e+37
    %v867 = vand.u32 %v812, 2147483648
    %v868 = vor.u32 1.1754944e-38, %v867
    %v869 = vsel %vm866, %v868, %v864
    %v870 = vrcp.pop %v815
    %v871 = vmul.f32 %v815, %v870
    %v872 = vsub.f32 1.0, %v871
    %v873 = vmul.f32 %v870, %v872
    %v874 = vadd.f32 %v870, %v873
    %vm875 = vweird.f32 %v815
    %vm876 = vweird.f32 %v870
    %vm877 = vmor %vm875, %vm876
    %v878 = vsel %vm877, %v870, %v874
    %v879 = vand.u32 2147483647, %v815
    %vm880 = vcmp.eq.f32.partialorder %v879, 8.507059e+37
    %v881 = vand.u32 %v815, 2147483648
    %v882 = vor.u32 1.1754944e-38, %v881
    %v883 = vsel %vm880, %v882, %v878
    %v884 = vrcp.pop %v818
    %v885 = vmul.f32 %v818, %v884
    %v886 = vsub.f32 1.0, %v885
    %v887 = vmul.f32 %v884, %v886
    %v888 = vadd.f32 %v884, %v887
    %vm889 = vweird.f32 %v818
    %vm890 = vweird.f32 %v884
    %vm891 = vmor %vm889, %vm890
    %v892 = vsel %vm891, %v884, %v888
    %v893 = vand.u32 2147483647, %v818
    %vm894 = vcmp.eq.f32.partialorder %v893, 8.507059e+37
    %v895 = vand.u32 %v818, 2147483648
    %v896 = vor.u32 1.1754944e-38, %v895
    %v897 = vsel %vm894, %v896, %v892
    %v898 = vrcp.pop %v821
    %v899 = vmul.f32 %v821, %v898
    %v900 = vsub.f32 1.0, %v899
    %v901 = vmul.f32 %v898, %v900
    %v902 = vadd.f32 %v898, %v901
    %vm903 = vweird.f32 %v821
    %vm904 = vweird.f32 %v898
    %vm905 = vmor %vm903, %vm904
    %v906 = vsel %vm905, %v898, %v902
    %v907 = vand.u32 2147483647, %v821
    %vm908 = vcmp.eq.f32.partialorder %v907, 8.507059e+37
    %v909 = vand.u32 %v821, 2147483648
    %v910 = vor.u32 1.1754944e-38, %v909
    %v911 = vsel %vm908, %v910, %v906
    %v912 = vrcp.pop %v824
    %v913 = vmul.f32 %v824, %v912
    %v914 = vsub.f32 1.0, %v913
    %v915 = vmul.f32 %v912, %v914
    %v916 = vadd.f32 %v912, %v915
    %vm917 = vweird.f32 %v824
    %vm918 = vweird.f32 %v912
    %vm919 = vmor %vm917, %vm918
    %v920 = vsel %vm919, %v912, %v916
    %v921 = vand.u32 2147483647, %v824
    %vm922 = vcmp.eq.f32.partialorder %v921, 8.507059e+37
    %v923 = vand.u32 %v824, 2147483648
    %v924 = vor.u32 1.1754944e-38, %v923
    %v925 = vsel %vm922, %v924, %v920
    %v926 = vrcp.pop %v827
    %v927 = vmul.f32 %v827, %v926
    %v928 = vsub.f32 1.0, %v927
    %v929 = vmul.f32 %v926, %v928
    %v930 = vadd.f32 %v926, %v929
    %vm931 = vweird.f32 %v827
    %vm932 = vweird.f32 %v926
    %vm933 = vmor %vm931, %vm932
    %v934 = vsel %vm933, %v926, %v930
    %v935 = vand.u32 2147483647, %v827
    %vm936 = vcmp.eq.f32.partialorder %v935, 8.507059e+37
    %v937 = vand.u32 %v827, 2147483648
    %v938 = vor.u32 1.1754944e-38, %v937
    %v939 = vsel %vm936, %v938, %v934
    %v940 = vmul.f32 %v773, %v841
    %v941 = vmul.f32 %v775, %v841
    %v942 = vmul.f32 %v777, %v855
    %v943 = vmul.f32 %v779, %v855
    %v944 = vmul.f32 %v781, %v869
    %v945 = vmul.f32 %v783, %v869
    %v946 = vmul.f32 %v785, %v883
    %v947 = vmul.f32 %v787, %v883
    %v948 = vmul.f32 %v789, %v897
    %v949 = vmul.f32 %v791, %v897
    %v950 = vmul.f32 %v793, %v911
    %v951 = vmul.f32 %v795, %v911
    %v952 = vmul.f32 %v797, %v925
    %v953 = vmul.f32 %v799, %v925
    %v954 = vmul.f32 %v801, %v939
    %v955 = vmul.f32 %v803, %v939
    %v956 = vpack.c.bf16 %v942, %v940
    %v957 = vpack.c.bf16 %v943, %v941
    %v958 = vpack.c.bf16 %v946, %v944
    %v959 = vpack.c.bf16 %v947, %v945
    %v960 = vpack.c.bf16 %v950, %v948
    %v961 = vpack.c.bf16 %v951, %v949
    %v962 = vpack.c.bf16 %v954, %v952
    %v963 = vpack.c.bf16 %v955, %v953
    %v966 = vunpack.c.l.b16 %v222
    %v967 = vunpack.c.h.b16 %v222
    %v968 = vunpack.c.l.b16 %v224
    %v969 = vunpack.c.h.b16 %v224
    %v970 = vpack.c.b16 %v968, %v966
    %v971 = vpack.c.b16 %v969, %v967
    %974 = vmatpush.bf16.xpose.msra.mxu0 0
    %975 = vmatpush.bf16.xpose.msra.mxu0 0
    %976 = vmatpush.bf16.xpose.msra.mxu0 0
    %977 = vmatpush.bf16.xpose.msra.mxu0 0
    %978 = vmatpush.bf16.xpose.msra.mxu0 %v962
    %979 = vmatpush.bf16.xpose.msra.mxu0 %v960
    %980 = vmatpush.bf16.xpose.msra.mxu0 %v958
    %981 = vmatpush.bf16.xpose.msra.mxu0 %v956
    %982 = vmatmul.bf16.gmra.mxu0 %v970
    %v983 = vpop.f32.mrf.mxu0
    %v984 = vadd.f32 0.0, %v983
    %v985 = vpop.f32.mrf.mxu0
    %v986 = vadd.f32 0.0, %v985
    %987 = vdwg.mxu0
    %988 = vmatpush.bf16.xpose.msra.mxu0 0
    %989 = vmatpush.bf16.xpose.msra.mxu0 0
    %990 = vmatpush.bf16.xpose.msra.mxu0 0
    %991 = vmatpush.bf16.xpose.msra.mxu0 0
    %992 = vmatpush.bf16.xpose.msra.mxu0 %v963
    %993 = vmatpush.bf16.xpose.msra.mxu0 %v961
    %994 = vmatpush.bf16.xpose.msra.mxu0 %v959
    %995 = vmatpush.bf16.xpose.msra.mxu0 %v957
    %996 = vmatmul.bf16.gmra.mxu0 %v971
    %v997 = vpop.f32.mrf.mxu0
    %v998 = vadd.f32 %v984, %v997
    %v999 = vpop.f32.mrf.mxu0
    %v1000 = vadd.f32 %v986, %v999
    %1001 = vdwg.mxu0
    %v1002 = vpack.c.bf16 %v998, %v998
    %v1003 = vpack.c.bf16 %v1000, %v1000
    %v1006 = vunpack.c.l.b16 %v631
    %v1007 = vunpack.c.l.b16 %v632
    %v1008 = vpack.c.b16 %v1007, %v1006
    %v1011 = vunpack.c.l.b16 %v1002
    %v1012 = vunpack.c.l.b16 %v1003
    %v1013 = vpack.c.b16 %v1012, %v1011
    %1014 = vrot.lane.b32.xlu0 %v1013, 64
    %v1015 = vpop.permute.xlu0 %1014
    %vm1016 = vcmask 523264
    %v1019 = vsel %vm1016, %v1008, %v1015
    %v1023 = vunpack.c.l.b16 %v24
    %v1024 = vunpack.c.l.b16 %v25
    %v1025 = vpack.c.b16 %v1024, %v1023
    %v1027 = vsel %vm57, %v1025, 0
    %1029 = vmatpush.bf16.msra.mxu0 0
    %1030 = vmatpush.bf16.msra.mxu0 0
    %1031 = vmatpush.bf16.msra.mxu0 0
    %1032 = vmatpush.bf16.msra.mxu0 0
    %1033 = vmatpush.bf16.msra.mxu0 0
    %1034 = vmatpush.bf16.msra.mxu0 0
    %1035 = vmatpush.bf16.msra.mxu0 0
    %1036 = vmatpush.bf16.msra.mxu0 %v1019
    %1037 = vmatmul.bf16.gmra.mxu0 %v1027
    %v1038 = vpop.f32.mrf.mxu0
    %v1039 = vadd.f32 0.0, %v1038
    %v1040 = vpop.f32.mrf.mxu0
    %1041 = vdwg.mxu0
    %1042 = vst [vmem:[#allocation2] sm:$0xff] %v1039
    // Predicated region
    $region14: #{tpu_custom_call.1} parent=1 // pred_check
      _
    $region15: #{tpu_custom_call.1} parent=1 // pred_check_branch
      %1044 = sbr.rel (0) target = $region17
    $region16: #{tpu_custom_call.1} parent=1 // pred_region
      %1046 = vsyncadd [#allocation3], 0
      %s1048 = sshll.u32 [#allocation2], 4
      %s1049 = int_to_ptr.vmem [resolvable:$true] %s1048
      %s1050 = sshll.u32 %s3, 4
      %s1051 = int_to_ptr.hbm [resolvable:$true] %s1050
      %1053 = dma.vmem_to_hbm [thread:$0]  %s1049, 128, %s1051, [#allocation3]
    $region17: #{tpu_custom_call.1} parent=1 // pred_fallthru
      _
    // Predicated region
    $region18: #{tpu_custom_call.1} parent=1 // pred_check
      _
    $region19: #{tpu_custom_call.1} parent=1 // pred_check_branch
      %1055 = sbr.rel (0) target = $region21
    $region20: #{tpu_custom_call.1} parent=1 // pred_region
      %1057 = dma.done [#allocation3], 128
    $region21: #{tpu_custom_call.1} parent=1 // pred_fallthru
      _
    %1058 = vsyncpa [#allocation3], 1

</llo_original>
